<compile_context>
chip_gen: v5e
topology: v5e:2x2
jax: 0.10.0
libtpu: 0.0.40
codegen_flags: <defaults>
</compile_context>

<pallas_src>
import jax
import jax.numpy as jnp
from jax.experimental import pallas as pl
from jax.experimental.pallas import tpu as pltpu


def _round_up(x, m):
    return ((x + m - 1) // m) * m


# ---------------------------------------------------------------------------
# Weight-stationary projection kernel:  o_tile = x_tile @ W + bias
#   grid = (cdiv(M, tm),)  -- one axis, streaming row slabs of patches.
#   Full-K, full-N blocks -> no reduction axis, no accumulator scratch.
# ---------------------------------------------------------------------------
def _patch_proj_kernel(x_ref, w_ref, b_ref, o_ref):
    acc = jnp.dot(x_ref[...], w_ref[...], preferred_element_type=jnp.float32)
    o_ref[...] = (acc + b_ref[...]).astype(o_ref.dtype)


def pallas_patch_projection(x2d, w, b, *, out_dtype=None, tm=512):
    """x2d: (M, K) patches, w: (K, N) projection, b: (N,) bias -> (M, N)."""
    M, K = x2d.shape
    K2, N = w.shape
    assert K == K2
    out_dtype = out_dtype if out_dtype is not None else x2d.dtype

    in_bytes = jnp.dtype(x2d.dtype).itemsize
    out_bytes = jnp.dtype(out_dtype).itemsize

    # Row-slab size: multiple of 8 (sublane) and of 256 for the v7x MXU when
    # large; clipped for tiny problems, shrunk if the VMEM estimate is too big.
    tm = min(tm, _round_up(M, 8))

    def vmem_est(tm_):
        # double-buffered x slab + resident W + f32 bias + output slab
        return 2 * (tm_ * K * in_bytes + K * N * in_bytes + N * 4
                    + tm_ * N * out_bytes)

    while tm > 256 and vmem_est(tm) > 40 * 1024 * 1024:
        tm //= 2
    # Explicit scoped-VMEM budget: above the 16 MiB v5e default, with headroom
    # under v7x's 64 MiB physical VMEM.
    vmem_limit = int(min(max(vmem_est(tm) * 3 // 2, 32 * 1024 * 1024),
                         48 * 1024 * 1024))

    bp = b.astype(jnp.float32).reshape(1, N)   # f32 bias, added once in-kernel

    cost = pl.CostEstimate(
        flops=2 * M * K * N,
        transcendentals=0,
        bytes_accessed=M * K * in_bytes + K * N * in_bytes + N * 4
        + M * N * out_bytes,
    )

    return pl.pallas_call(
        _patch_proj_kernel,
        out_shape=jax.ShapeDtypeStruct((M, N), out_dtype),
        grid=(pl.cdiv(M, tm),),
        in_specs=[
            pl.BlockSpec((tm, K), lambda i: (i, 0)),   # streamed patch slab
            pl.BlockSpec((K, N), lambda i: (0, 0)),    # resident weight
            pl.BlockSpec((1, N), lambda i: (0, 0)),    # resident f32 bias
        ],
        out_specs=pl.BlockSpec((tm, N), lambda i: (i, 0)),
        compiler_params=pltpu.CompilerParams(
            dimension_semantics=("parallel",),
            vmem_limit_bytes=vmem_limit,
        ),
        cost_estimate=cost,
    )(x2d, w, bp)


# ---------------------------------------------------------------------------
# im2col for the non-overlapping 3D patches (stride == kernel Conv3d).
# Pure layout transform; the strided gather is not a rectangular BlockSpec
# window, so it is left to XLA (inputs are cast to bf16 first to halve its
# HBM traffic).
# TODO(synk): fuse this strided patch gather into the Pallas call (via
# allow_input_fusion on the patches operand or a manual-DMA gather) to drop
# the extra activation HBM round trip on v5e/v6e.
# ---------------------------------------------------------------------------
def _extract_tubelet_patches(x, tubelet, ph, pw):
    B, C, T, H, W = x.shape
    Tt, Hp, Wp = T // tubelet, H // ph, W // pw
    x = x.reshape(B, C, Tt, tubelet, Hp, ph, Wp, pw)
    # -> (B, Tt, Hp, Wp, C, tubelet, ph, pw): token order matches the conv
    #    output's flatten(2); contraction order matches the weight layout.
    x = x.transpose(0, 2, 4, 6, 1, 3, 5, 7)
    return x.reshape(B * Tt * Hp * Wp, C * tubelet * ph * pw)


# ---------------------------------------------------------------------------
# Full module forward:  x (B, C, T, H, W) -> (B, num_patches, embed_dim)
#   weight: (embed_dim, C, tubelet, ph, pw)  (PyTorch Conv3d layout)
#   bias:   (embed_dim,)
# compute_dtype=bfloat16 feeds the MXU at bf16 peak; accumulation/bias/output
# stay in f32 (pass compute_dtype=None to keep the exact f32 path).
# ---------------------------------------------------------------------------
def patch_embed_forward(x, weight, bias, *, tubelet_size, patch_size,
                        compute_dtype=jnp.bfloat16, tm=512):
    B, C, T, H, W = x.shape
    ph, pw = patch_size
    assert H % ph == 0 and W % pw == 0 and T % tubelet_size == 0, (
        "input dims must be divisible by patch/tubelet size"
    )
    E = weight.shape[0]
    out_dtype = x.dtype
    cdtype = compute_dtype if compute_dtype is not None else x.dtype

    xs = x.astype(cdtype)                                   # cast BEFORE im2col
    patches = _extract_tubelet_patches(xs, tubelet_size, ph, pw)   # (M, K)
    w_mat = weight.reshape(E, -1).T.astype(cdtype)                 # (K, E)
    y = pallas_patch_projection(patches, w_mat, bias,
                                out_dtype=out_dtype, tm=tm)        # (M, E)

    num_patches = (T // tubelet_size) * (H // ph) * (W // pw)
    return y.reshape(B, num_patches, E)


# ---------------------------------------------------------------------------
# Pure-JAX reference (mirrors the PyTorch Conv3d forward exactly)
# ---------------------------------------------------------------------------
def patch_embed_reference(x, weight, bias, *, tubelet_size, patch_size):
    ph, pw = patch_size
    y = jax.lax.conv_general_dilated(
        x,
        weight,
        window_strides=(tubelet_size, ph, pw),
        padding="VALID",
        dimension_numbers=("NCDHW", "OIDHW", "NCDHW"),
    )
    B, E = y.shape[0], y.shape[1]
    y = y.reshape(B, E, -1).transpose(0, 2, 1)  # flatten(2).transpose(1, 2)
    return y + bias.reshape(1, 1, E)


# ---------------------------------------------------------------------------
if __name__ == "__main__":
    # Small, module-consistent shapes: video input (B, C, T, H, W).
    B, C, T, H, W = 2, 3, 4, 16, 16
    patch_size = (8, 8)
    tubelet_size = 2
    embed_dim = 128   # lane-dense output width

    key = jax.random.PRNGKey(0)
    k1, k2, k3 = jax.random.split(key, 3)

    x = jax.random.normal(k1, (B, C, T, H, W), jnp.float32)
    weight = 0.05 * jax.random.normal(
        k2, (embed_dim, C, tubelet_size, patch_size[0], patch_size[1]),
        jnp.float32,
    )
    bias = 0.01 * jax.random.normal(k3, (embed_dim,), jnp.float32)

    num_patches = (T // tubelet_size) * (H // patch_size[0]) * (W // patch_size[1])

    # 1) Exact f32 compute path vs the Conv3d reference.
    out_f32 = patch_embed_forward(
        x, weight, bias, tubelet_size=tubelet_size, patch_size=patch_size,
        compute_dtype=None,
    )
    out_f32 = jax.block_until_ready(out_f32)
    ref_f32 = patch_embed_reference(
        x, weight, bias, tubelet_size=tubelet_size, patch_size=patch_size
    )
    assert out_f32.shape == (B, num_patches, embed_dim), out_f32.shape
    assert jnp.allclose(out_f32, ref_f32, atol=1e-4, rtol=1e-4), "f32 mismatch"

    # 2) Default bf16 MXU fast path vs a reference fed the same bf16-quantized
    #    inputs (f32 accumulation on both sides).
    out_bf = patch_embed_forward(
        x, weight, bias, tubelet_size=tubelet_size, patch_size=patch_size
    )
    out_bf = jax.block_until_ready(out_bf)
    ref_bf = patch_embed_reference(
        x.astype(jnp.bfloat16).astype(jnp.float32),
        weight.astype(jnp.bfloat16).astype(jnp.float32),
        bias, tubelet_size=tubelet_size, patch_size=patch_size,
    )
    assert out_bf.shape == (B, num_patches, embed_dim), out_bf.shape
    assert out_bf.dtype == jnp.float32
    assert jnp.allclose(out_bf, ref_bf, atol=2e-2, rtol=2e-2), "bf16 mismatch"

    print("KERNEL_OK")
</pallas_src>

<mosaic_0001>
module attributes {stable_mosaic.version = 11 : i64} {
  func.func @_patch_proj_kernel(%arg0: i32, %arg1: memref<16x384xf32, #tpu.memory_space<vmem>>, %arg2: memref<384x128xf32, #tpu.memory_space<vmem>>, %arg3: memref<1x128xf32, #tpu.memory_space<vmem>>, %arg4: memref<16x128xf32, #tpu.memory_space<vmem>>) attributes {dimension_semantics = [#tpu.dimension_semantics<parallel>], iteration_bounds = array<i64: 1>, scalar_prefetch = 0 : i64, scratch_operands = 0 : i64, tpu.core_type = #tpu.core_type<tc>, window_params = [{transform_indices = @transform_0, window_bounds = array<i64: 16, 384>}, {pipeline_mode = #tpu.pipeline_mode<synchronous>, transform_indices = @transform_1, window_bounds = array<i64: 384, 128>}, {pipeline_mode = #tpu.pipeline_mode<synchronous>, transform_indices = @transform_2, window_bounds = array<i64: 1, 128>}, {transform_indices = @transform_3, window_bounds = array<i64: 16, 128>}]} {
    %c0 = arith.constant 0 : index
    %c0_0 = arith.constant 0 : index
    %0 = vector.load %arg1[%c0, %c0_0] : memref<16x384xf32, #tpu.memory_space<vmem>>, vector<16x384xf32>
    %c0_1 = arith.constant 0 : index
    %c0_2 = arith.constant 0 : index
    %1 = vector.load %arg2[%c0_1, %c0_2] : memref<384x128xf32, #tpu.memory_space<vmem>>, vector<384x128xf32>
    %cst = arith.constant dense<0.000000e+00> : vector<16x128xf32>
    %2 = tpu.matmul %0, %1, %cst {dimension_numbers = #tpu.dot_dimension_numbers<[1], [0], [0], [1], [0, 0, 1, 1], [], []>} : vector<16x384xf32>, vector<384x128xf32>, vector<16x128xf32> -> vector<16x128xf32>
    %c0_3 = arith.constant 0 : index
    %c0_4 = arith.constant 0 : index
    %3 = vector.load %arg3[%c0_3, %c0_4] : memref<1x128xf32, #tpu.memory_space<vmem>>, vector<1x128xf32>
    %4 = vector.broadcast %3 : vector<1x128xf32> to vector<16x128xf32>
    %5 = arith.addf %2, %4 : vector<16x128xf32>
    %c0_5 = arith.constant 0 : index
    %c0_6 = arith.constant 0 : index
    %6 = vector.load %arg4[%c0_5, %c0_6] : memref<16x128xf32, #tpu.memory_space<vmem>>, vector<16x128xf32>
    tpu.vector_store %arg4[%c0_5, %c0_6], %5 {strides = array<i32>} : memref<16x128xf32, #tpu.memory_space<vmem>>, vector<16x128xf32>,
    return
  }
  func.func @transform_0(%arg0: i32) -> (i32, i32) {
    %c0_i32 = arith.constant 0 : i32
    %c0_i32_0 = arith.constant 0 : i32
    return %arg0, %c0_i32 : i32, i32
  }
  func.func @transform_1(%arg0: i32) -> (i32, i32) {
    %c0_i32 = arith.constant 0 : i32
    %c0_i32_0 = arith.constant 0 : i32
    %c0_i32_1 = arith.constant 0 : i32
    return %c0_i32, %c0_i32_0 : i32, i32
  }
  func.func @transform_2(%arg0: i32) -> (i32, i32) {
    %c0_i32 = arith.constant 0 : i32
    %c0_i32_0 = arith.constant 0 : i32
    %c0_i32_1 = arith.constant 0 : i32
    return %c0_i32, %c0_i32_0 : i32, i32
  }
  func.func @transform_3(%arg0: i32) -> (i32, i32) {
    %c0_i32 = arith.constant 0 : i32
    %c0_i32_0 = arith.constant 0 : i32
    return %arg0, %c0_i32 : i32, i32
  }
}

</mosaic_0001>

<llo_original>
// kernel: tpu_custom_call.1
$region0: #{tpu_custom_call.1}
  #allocation0 [shape = 'u32[]', space=smem, size = 0x4, offset = 0x4, fixed_abs, tag = 'smem constant byte address 0x4 - core index']
  #allocation1 [shape = 'u32[72,128]{1,0:T(1,128)}', space=vmem, size = 0x9000, scoped, tag = 'internal scratch']
  %s0 = inlined_call_operand.hbm [shape: f32[16,384], index: 0, kind: input, shape index: {}]
  %s1 = inlined_call_operand.hbm [shape: f32[384,128], index: 1, kind: input, shape index: {}]
  %s2 = inlined_call_operand.vmem [shape: f32[1,128], index: 2, kind: input, shape index: {}]
  %s3 = inlined_call_operand.hbm [shape: f32[16,128], index: 3, kind: output, shape index: {}]
  %s4 = sld [smem:[#allocation0]]
  $region30: #{tpu_custom_call.1} parent=0
    _
  %s6 = ssub.s32 1, %s4
  %s7 = scalar_select 0, %s6, %s4
  $region1: #{tpu_custom_call.1} parent=0
    #allocation2 [shape = 'u8[24576]{0}', space=vmem, size = 0x6000, scoped, tag = 'input window, operand 0, single buffered']
    #allocation3 [shape = 's32[1]{0}', space=sflag, size = 0x4, scoped, tag = 'scoped memory for tpu_custom_call.1']
    #allocation4 [shape = 's32[1]{0}', space=sflag, size = 0x4, scoped, tag = 'scoped memory for tpu_custom_call.1']
    #allocation5 [shape = 'u8[196608]{0}', space=vmem, size = 0x30000, scoped, tag = 'input window, operand 1, single buffered']
    #allocation6 [shape = 's32[1]{0}', space=sflag, size = 0x4, scoped, tag = 'scoped memory for tpu_custom_call.1']
    #allocation7 [shape = 'u8[8192]{0}', space=vmem, size = 0x2000, scoped, tag = 'output window, operand 0, single buffered']
    %8 = vsyncpa [#allocation3], 0
    %9 = vsyncpa [#allocation6], 0
    %10 = vsyncpa [#allocation4], 0
    // Predicated region
    $region2: #{tpu_custom_call.1} parent=1 // pred_check
      _
    $region3: #{tpu_custom_call.1} parent=1 // pred_check_branch
      %12 = sbr.rel (0) target = $region5
    $region4: #{tpu_custom_call.1} parent=1 // pred_region
      %14 = vsyncadd [#allocation3], 0
      %s15 = sshll.u32 %s0, 4
      %s16 = int_to_ptr.hbm [resolvable:$true] %s15
      %s17 = sshll.u32 [#allocation2], 4
      %s18 = int_to_ptr.vmem [resolvable:$true] %s17
      %23 = dma.hbm_to_vmem [thread:$0]  %s16, 768, %s18, [#allocation3], 384, 384, 24
    $region5: #{tpu_custom_call.1} parent=1 // pred_fallthru
      _
    // Predicated region
    $region6: #{tpu_custom_call.1} parent=1 // pred_check
      _
    $region7: #{tpu_custom_call.1} parent=1 // pred_check_branch
      %25 = sbr.rel (0) target = $region9
    $region8: #{tpu_custom_call.1} parent=1 // pred_region
      %27 = vsyncadd [#allocation6], 0
      %s28 = sshll.u32 %s1, 4
      %s29 = int_to_ptr.hbm [resolvable:$true] %s28
      %s30 = sshll.u32 [#allocation5], 4
      %s31 = int_to_ptr.vmem [resolvable:$true] %s30
      %36 = dma.hbm_to_vmem [thread:$0]  %s29, 6144, %s31, [#allocation6], 128, 128, 8
    $region9: #{tpu_custom_call.1} parent=1 // pred_fallthru
      _
    // Predicated region
    $region10: #{tpu_custom_call.1} parent=1 // pred_check
      _
    $region11: #{tpu_custom_call.1} parent=1 // pred_check_branch
      %38 = sbr.rel (0) target = $region13
    $region12: #{tpu_custom_call.1} parent=1 // pred_region
      _
    $region13: #{tpu_custom_call.1} parent=1 // pred_fallthru
      _
    // Predicated region
    $region14: #{tpu_custom_call.1} parent=1 // pred_check
      _
    $region15: #{tpu_custom_call.1} parent=1 // pred_check_branch
      %40 = sbr.rel (0) target = $region17
    $region16: #{tpu_custom_call.1} parent=1 // pred_region
      %42 = dma.done [#allocation3], 768
    $region17: #{tpu_custom_call.1} parent=1 // pred_fallthru
      _
    // Predicated region
    $region18: #{tpu_custom_call.1} parent=1 // pred_check
      _
    $region19: #{tpu_custom_call.1} parent=1 // pred_check_branch
      %44 = sbr.rel (0) target = $region21
    $region20: #{tpu_custom_call.1} parent=1 // pred_region
      %46 = dma.done [#allocation6], 6144
    $region21: #{tpu_custom_call.1} parent=1 // pred_fallthru
      _
    %v47 = vld [vmem:[#allocation2] sm:$0xff]
    %v48 = vld [vmem:[#allocation2 + $0x8] sm:$0xff]
    %v49 = vld [vmem:[#allocation2 + $0x10] sm:$0xff]
    %v50 = vld [vmem:[#allocation2 + $0x18] sm:$0xff]
    %v51 = vld [vmem:[#allocation2 + $0x20] sm:$0xff]
    %v52 = vld [vmem:[#allocation2 + $0x28] sm:$0xff]
    %v53 = vld [vmem:[#allocation5] sm:$0xff]
    %v54 = vld [vmem:[#allocation5 + $0x8] sm:$0xff]
    %v55 = vld [vmem:[#allocation5 + $0x10] sm:$0xff]
    %v56 = vld [vmem:[#allocation5 + $0x18] sm:$0xff]
    %v57 = vld [vmem:[#allocation5 + $0x20] sm:$0xff]
    %v58 = vld [vmem:[#allocation5 + $0x28] sm:$0xff]
    %v59 = vld [vmem:[#allocation5 + $0x30] sm:$0xff]
    %v60 = vld [vmem:[#allocation5 + $0x38] sm:$0xff]
    %v61 = vld [vmem:[#allocation5 + $0x40] sm:$0xff]
    %v62 = vld [vmem:[#allocation5 + $0x48] sm:$0xff]
    %v63 = vld [vmem:[#allocation5 + $0x50] sm:$0xff]
    %v64 = vld [vmem:[#allocation5 + $0x58] sm:$0xff]
    %v65 = vld [vmem:[#allocation5 + $0x60] sm:$0xff]
    %v66 = vld [vmem:[#allocation5 + $0x68] sm:$0xff]
    %v67 = vld [vmem:[#allocation5 + $0x70] sm:$0xff]
    %v68 = vld [vmem:[#allocation5 + $0x78] sm:$0xff]
    %v69 = vld [vmem:[#allocation5 + $0x80] sm:$0xff]
    %v70 = vld [vmem:[#allocation5 + $0x88] sm:$0xff]
    %v71 = vld [vmem:[#allocation5 + $0x90] sm:$0xff]
    %v72 = vld [vmem:[#allocation5 + $0x98] sm:$0xff]
    %v73 = vld [vmem:[#allocation5 + $0xa0] sm:$0xff]
    %v74 = vld [vmem:[#allocation5 + $0xa8] sm:$0xff]
    %v75 = vld [vmem:[#allocation5 + $0xb0] sm:$0xff]
    %v76 = vld [vmem:[#allocation5 + $0xb8] sm:$0xff]
    %v77 = vld [vmem:[#allocation5 + $0xc0] sm:$0xff]
    %v78 = vld [vmem:[#allocation5 + $0xc8] sm:$0xff]
    %v79 = vld [vmem:[#allocation5 + $0xd0] sm:$0xff]
    %v80 = vld [vmem:[#allocation5 + $0xd8] sm:$0xff]
    %v81 = vld [vmem:[#allocation5 + $0xe0] sm:$0xff]
    %v82 = vld [vmem:[#allocation5 + $0xe8] sm:$0xff]
    %v83 = vld [vmem:[#allocation5 + $0xf0] sm:$0xff]
    %v84 = vld [vmem:[#allocation5 + $0xf8] sm:$0xff]
    %v85 = vld [vmem:[#allocation5 + $0x100] sm:$0xff]
    %v86 = vld [vmem:[#allocation5 + $0x108] sm:$0xff]
    %v87 = vld [vmem:[#allocation5 + $0x110] sm:$0xff]
    %v88 = vld [vmem:[#allocation5 + $0x118] sm:$0xff]
    %v89 = vld [vmem:[#allocation5 + $0x120] sm:$0xff]
    %v90 = vld [vmem:[#allocation5 + $0x128] sm:$0xff]
    %v91 = vld [vmem:[#allocation5 + $0x130] sm:$0xff]
    %v92 = vld [vmem:[#allocation5 + $0x138] sm:$0xff]
    %v93 = vld [vmem:[#allocation5 + $0x140] sm:$0xff]
    %v94 = vld [vmem:[#allocation5 + $0x148] sm:$0xff]
    %v95 = vld [vmem:[#allocation5 + $0x150] sm:$0xff]
    %v96 = vld [vmem:[#allocation5 + $0x158] sm:$0xff]
    %v97 = vld [vmem:[#allocation5 + $0x160] sm:$0xff]
    %v98 = vld [vmem:[#allocation5 + $0x168] sm:$0xff]
    %v99 = vld [vmem:[#allocation5 + $0x170] sm:$0xff]
    %v100 = vld [vmem:[#allocation5 + $0x178] sm:$0xff]
    %v101 = vld [vmem:[%s2] sm:$0x1]
    %v103 = vperm.slane %v101, 0
    %105 = vmatpush.msra.mxu0 %v68
    %106 = vmatpush.msra.mxu0 %v67
    %107 = vmatpush.msra.mxu0 %v66
    %108 = vmatpush.msra.mxu0 %v65
    %109 = vmatpush.msra.mxu0 %v64
    %110 = vmatpush.msra.mxu0 %v63
    %111 = vmatpush.msra.mxu0 %v62
    %112 = vmatpush.msra.mxu0 %v61
    %113 = vmatpush.msra.mxu0 %v60
    %114 = vmatpush.msra.mxu0 %v59
    %115 = vmatpush.msra.mxu0 %v58
    %116 = vmatpush.msra.mxu0 %v57
    %117 = vmatpush.msra.mxu0 %v56
    %118 = vmatpush.msra.mxu0 %v55
    %119 = vmatpush.msra.mxu0 %v54
    %120 = vmatpush.msra.mxu0 %v53
    %121 = vmatmul.f32.gmra.mxu0 %v47
    %v122 = vpop.f32.mrf.mxu0
    %v123 = vadd.f32 %v103, %v122
    %124 = vmatmul.f32.gmra.mxu0 %v50
    %v125 = vpop.f32.mrf.mxu0
    %v126 = vadd.f32 %v103, %v125
    %127 = vdwg.mxu0
    %128 = vmatpush.msra.mxu0 %v84
    %129 = vmatpush.msra.mxu0 %v83
    %130 = vmatpush.msra.mxu0 %v82
    %131 = vmatpush.msra.mxu0 %v81
    %132 = vmatpush.msra.mxu0 %v80
    %133 = vmatpush.msra.mxu0 %v79
    %134 = vmatpush.msra.mxu0 %v78
    %135 = vmatpush.msra.mxu0 %v77
    %136 = vmatpush.msra.mxu0 %v76
    %137 = vmatpush.msra.mxu0 %v75
    %138 = vmatpush.msra.mxu0 %v74
    %139 = vmatpush.msra.mxu0 %v73
    %140 = vmatpush.msra.mxu0 %v72
    %141 = vmatpush.msra.mxu0 %v71
    %142 = vmatpush.msra.mxu0 %v70
    %143 = vmatpush.msra.mxu0 %v69
    %144 = vmatmul.f32.gmra.mxu0 %v48
    %v145 = vpop.f32.mrf.mxu0
    %v146 = vadd.f32 %v123, %v145
    %147 = vmatmul.f32.gmra.mxu0 %v51
    %v148 = vpop.f32.mrf.mxu0
    %v149 = vadd.f32 %v126, %v148
    %150 = vdwg.mxu0
    %151 = vmatpush.msra.mxu0 %v100
    %152 = vmatpush.msra.mxu0 %v99
    %153 = vmatpush.msra.mxu0 %v98
    %154 = vmatpush.msra.mxu0 %v97
    %155 = vmatpush.msra.mxu0 %v96
    %156 = vmatpush.msra.mxu0 %v95
    %157 = vmatpush.msra.mxu0 %v94
    %158 = vmatpush.msra.mxu0 %v93
    %159 = vmatpush.msra.mxu0 %v92
    %160 = vmatpush.msra.mxu0 %v91
    %161 = vmatpush.msra.mxu0 %v90
    %162 = vmatpush.msra.mxu0 %v89
    %163 = vmatpush.msra.mxu0 %v88
    %164 = vmatpush.msra.mxu0 %v87
    %165 = vmatpush.msra.mxu0 %v86
    %166 = vmatpush.msra.mxu0 %v85
    %167 = vmatmul.f32.gmra.mxu0 %v49
    %v168 = vpop.f32.mrf.mxu0
    %v169 = vadd.f32 %v146, %v168
    %170 = vmatmul.f32.gmra.mxu0 %v52
    %v171 = vpop.f32.mrf.mxu0
    %v172 = vadd.f32 %v149, %v171
    %173 = vdwg.mxu0
    %174 = vst [vmem:[#allocation7] sm:$0xff] %v169
    %175 = vst [vmem:[#allocation7 + $0x8] sm:$0xff] %v172
    // Predicated region
    $region22: #{tpu_custom_call.1} parent=1 // pred_check
      _
    $region23: #{tpu_custom_call.1} parent=1 // pred_check_branch
      %177 = sbr.rel (0) target = $region25
    $region24: #{tpu_custom_call.1} parent=1 // pred_region
      %179 = vsyncadd [#allocation4], 0
      %s180 = sshll.u32 [#allocation7], 4
      %s181 = int_to_ptr.vmem [resolvable:$true] %s180
      %s182 = sshll.u32 %s3, 4
      %s183 = int_to_ptr.hbm [resolvable:$true] %s182
      %188 = dma.vmem_to_hbm [thread:$0]  %s181, 256, %s183, [#allocation4], 128, 128, 8
    $region25: #{tpu_custom_call.1} parent=1 // pred_fallthru
      _
    // Predicated region
    $region26: #{tpu_custom_call.1} parent=1 // pred_check
      _
    $region27: #{tpu_custom_call.1} parent=1 // pred_check_branch
      %190 = sbr.rel (0) target = $region29
    $region28: #{tpu_custom_call.1} parent=1 // pred_region
      %192 = dma.done [#allocation4], 256
    $region29: #{tpu_custom_call.1} parent=1 // pred_fallthru
      _
    %193 = vsyncpa [#allocation3], 1
    %194 = vsyncpa [#allocation6], 1
    %195 = vsyncpa [#allocation4], 1

</llo_original>
